<compile_context>
chip_gen: v7x
topology: tpu7x:2x2x1
jax: 0.10.0
libtpu: 0.0.40
codegen_flags: <defaults>
</compile_context>

<pallas_src>
import math

import jax
import jax.numpy as jnp
from jax.experimental import pallas as pl
from jax.experimental.pallas import tpu as pltpu


_LANE = 128                    # TPU lane width
_MIN_KERNEL_ELEMS = 8 * 1024   # below this the grid is pure launch overhead
_MIN_PIPELINE_STEPS = 4        # >= 2 x TensorCores (v7x) and enables overlap of
                               # read-DMA(i+1) with write-DMA(i-1)


def _copy_kernel(x_ref, o_ref):
    # Pure identity copy of the current (block_rows, lanes) block.
    o_ref[...] = x_ref[...]


def _hw_params():
    """Per-generation (per-buffer block byte cap, vmem_limit_bytes)."""
    block_cap = 4 * 1024 * 1024
    vmem_limit = 48 * 1024 * 1024
    try:
        kind = jax.devices()[0].device_kind.lower()
    except Exception:
        return block_cap, vmem_limit
    if "v5 lite" in kind or "v5e" in kind or "v5litepod" in kind:
        # ~0.8 TB/s HBM, 128 MiB VMEM: 4 MiB blocks already ~95% efficient.
        return 4 * 1024 * 1024, 64 * 1024 * 1024
    if "v6" in kind:
        # 1.4 TB/s HBM, 128 MiB VMEM: 8 MiB blocks cut per-step overhead <5%.
        return 8 * 1024 * 1024, 64 * 1024 * 1024
    # v7x (and unknown/newer): 3.2 TB/s HBM, 64 MiB physical VMEM per core.
    # 8 MiB blocks -> 4 buffers = 32 MiB, headroom under a 48 MiB scoped limit.
    return 8 * 1024 * 1024, 48 * 1024 * 1024


def _sublane_multiple(itemsize):
    # Sub-32-bit dtypes pack along sublanes: f32 -> 8, bf16 -> 16, int8/fp8 -> 32.
    return max(8, 32 // max(1, itemsize))


def _pick_slab_tiling(total, itemsize, block_bytes_cap):
    """Choose a lane-dense 2-D slab (rows, lanes) and a sublane-dense row block.

    Returns (lanes, rows, block_rows) or None if `total` has no 128-lane
    factorization (caller falls back to an XLA copy).
    """
    lanes = None
    for cand in (2048, 1024, 512, 256, _LANE):
        if total % cand == 0:
            lanes = cand
            break
    if lanes is None:
        return None
    rows = total // lanes

    sub = _sublane_multiple(itemsize)
    if rows < sub:
        # Tiny slab: single full-extent block (legal: block dim == array dim).
        return lanes, rows, rows

    row_bytes = lanes * itemsize
    cap_rows = max(sub, (block_bytes_cap // row_bytes) // sub * sub)

    # Force >= _MIN_PIPELINE_STEPS grid steps so the pipeline can overlap the
    # prefetch of block i+1 with the writeback of block i-1 (a single-step
    # grid serializes HBM read and write).  Rounding down to a sublane
    # multiple only increases the step count, never decreases it.
    desired = -(-rows // _MIN_PIPELINE_STEPS)          # ceil(rows / steps)
    desired = max(sub, (desired // sub) * sub)         # sublane-dense block
    block_rows = min(cap_rows, desired)
    return lanes, rows, block_rows


def _copy_with_kernel(x_flat):
    """Identity copy of a flat (total,) payload via a tiled Pallas kernel."""
    total = x_flat.shape[0]
    itemsize = jnp.dtype(x_flat.dtype).itemsize
    block_cap, vmem_limit = _hw_params()
    tiling = _pick_slab_tiling(total, itemsize, block_cap)
    if tiling is None:
        return None
    lanes, rows, block_rows = tiling

    slab = x_flat.reshape(rows, lanes)      # row-major, metadata-only
    grid = (pl.cdiv(rows, block_rows),)     # ragged last block handled by Pallas

    out = pl.pallas_call(
        _copy_kernel,
        out_shape=jax.ShapeDtypeStruct((rows, lanes), x_flat.dtype),
        grid_spec=pltpu.PrefetchScalarGridSpec(
            num_scalar_prefetch=0,
            grid=grid,
            in_specs=[pl.BlockSpec((block_rows, lanes), lambda i: (i, 0))],
            out_specs=pl.BlockSpec((block_rows, lanes), lambda i: (i, 0)),
        ),
        compiler_params=pltpu.CompilerParams(
            dimension_semantics=("parallel",),   # shards steps across v7x's 2 TCs
            vmem_limit_bytes=vmem_limit,
        ),
        cost_estimate=pl.CostEstimate(
            flops=0, transcendentals=0, bytes_accessed=2 * total * itemsize),
    )(slab)
    return out.reshape(total)


def reshape_pallas(x, shape, force_copy=False):
    """Equivalent of Reshape(shape).forward(x): x.view(x.shape[0], *shape).

    Default path: zero-cost metadata reshape (matches torch .view exactly).
    force_copy=True: always returns a freshly materialized buffer — through the
    Pallas copy kernel when a lane-dense tiling exists and the payload is large
    enough, otherwise through an explicit XLA copy (never a silent view).
    """
    b = x.shape[0]
    f = math.prod(x.shape[1:])
    tgt_f = math.prod(shape)
    assert f == tgt_f, f"cannot view {x.shape} as (batch, {shape})"

    if not force_copy:
        # The whole module is a row-major view: pure metadata, no HBM traffic.
        return x.reshape(b, *shape)

    total = b * f
    if total >= _MIN_KERNEL_ELEMS:
        copied = _copy_with_kernel(x.reshape(total))
        if copied is not None:
            return copied.reshape(b, *shape)
    # Tiny or non-128-factorable payload: still honor the copy contract.
    return jnp.copy(x).reshape(b, *shape)


if __name__ == "__main__":
    key = jax.random.PRNGKey(0)

    # Module-spec input: conv-style NCHW activation (B=2, C=4, H=16, W=16).
    x = jax.random.normal(key, (2, 4, 16, 16), dtype=jnp.float32)

    # Reshape([4*16*16]): default path — pure metadata view.
    y = jax.block_until_ready(reshape_pallas(x, [4 * 16 * 16]))
    assert y.shape == (2, 1024), y.shape
    assert jnp.array_equal(y, x.reshape(2, 1024)), "mismatch vs reference reshape"

    # Reshape([16, 8, 8]): multi-dim target shape.
    y2 = jax.block_until_ready(reshape_pallas(x, [16, 8, 8]))
    assert y2.shape == (2, 16, 8, 8)
    assert jnp.array_equal(y2, x.reshape(2, 16, 8, 8))

    # force_copy on a tiny payload: explicit XLA copy fallback (still a copy).
    y3 = jax.block_until_ready(reshape_pallas(x, [1024], force_copy=True))
    assert y3.shape == (2, 1024)
    assert jnp.array_equal(y3, x.reshape(2, 1024))

    # Pallas copy kernel, f32, pipelined grid (4 steps of ~1 MiB blocks).
    xa = jax.random.normal(jax.random.PRNGKey(1), (16, 64, 32, 32), jnp.float32)
    ya = jax.block_until_ready(reshape_pallas(xa, [64, 32 * 32], force_copy=True))
    assert ya.shape == (16, 64, 1024)
    assert jnp.array_equal(ya, xa.reshape(16, 64, 1024))

    # Pallas copy kernel, bf16: dtype-aware 16-row sublane blocks.
    xb = jax.random.normal(jax.random.PRNGKey(2), (8, 64, 32, 32), jnp.bfloat16)
    yb = jax.block_until_ready(reshape_pallas(xb, [64 * 32 * 32], force_copy=True))
    assert yb.shape == (8, 65536)
    assert jnp.array_equal(yb, xb.reshape(8, 65536))

    # Pallas copy kernel with an awkward row count (150 rows -> ragged last
    # block instead of degenerate 8-row blocks).
    xc = jax.random.normal(jax.random.PRNGKey(3), (12, 64, 20, 20), jnp.float32)
    yc = jax.block_until_ready(reshape_pallas(xc, [64, 400], force_copy=True))
    assert yc.shape == (12, 64, 400)
    assert jnp.array_equal(yc, xc.reshape(12, 64, 400))

    print("KERNEL_OK")
</pallas_src>

<mosaic_0001>
module attributes {stable_mosaic.version = 11 : i64} {
  func.func @_copy_kernel(%arg0: i32, %arg1: memref<128x2048xf32, #tpu.memory_space<vmem>>, %arg2: memref<128x2048xf32, #tpu.memory_space<vmem>>) attributes {dimension_semantics = [#tpu.dimension_semantics<parallel>], iteration_bounds = array<i64: 4>, scalar_prefetch = 0 : i64, scratch_operands = 0 : i64, tpu.core_type = #tpu.core_type<tc>, window_params = [{transform_indices = @transform_0, window_bounds = array<i64: 128, 2048>}, {transform_indices = @transform_1, window_bounds = array<i64: 128, 2048>}]} {
    %c0 = arith.constant 0 : index
    %c0_0 = arith.constant 0 : index
    %0 = vector.load %arg1[%c0, %c0_0] : memref<128x2048xf32, #tpu.memory_space<vmem>>, vector<128x2048xf32>
    %c0_1 = arith.constant 0 : index
    %c0_2 = arith.constant 0 : index
    %1 = vector.load %arg2[%c0_1, %c0_2] : memref<128x2048xf32, #tpu.memory_space<vmem>>, vector<128x2048xf32>
    tpu.vector_store %arg2[%c0_1, %c0_2], %0 {strides = array<i32>} : memref<128x2048xf32, #tpu.memory_space<vmem>>, vector<128x2048xf32>,
    return
  }
  func.func @transform_0(%arg0: i32) -> (i32, i32) {
    %c0_i32 = arith.constant 0 : i32
    %c0_i32_0 = arith.constant 0 : i32
    return %arg0, %c0_i32 : i32, i32
  }
  func.func @transform_1(%arg0: i32) -> (i32, i32) {
    %c0_i32 = arith.constant 0 : i32
    %c0_i32_0 = arith.constant 0 : i32
    return %arg0, %c0_i32 : i32, i32
  }
}

</mosaic_0001>

<llo_original>
// kernel: tpu_custom_call.1
$region0: #{tpu_custom_call.1}
  #allocation0 [shape = 'u32[]', space=smem, size = 0x4, offset = 0x4, fixed_abs, tag = 'smem constant byte address 0x4 - core index']
  #allocation1 [shape = 'u32[144,128]{1,0:T(1,128)}', space=vmem, size = 0x12000, scoped, tag = 'internal scratch']
  %s0 = inlined_call_operand.hbm [shape: f32[512,2048], index: 0, kind: input, shape index: {}]
  %s1 = inlined_call_operand.hbm [shape: f32[512,2048], index: 1, kind: output, shape index: {}]
  %s2 = sld [smem:[#allocation0]]
  $region41: #{tpu_custom_call.1} parent=0
    _
  %s4 = ssub.s32 1, %s2
  %s5 = scalar_select 0, %s4, %s2
  $region1: #{tpu_custom_call.1} parent=0
    #allocation2 [shape = 'u8[2097152]{0}', space=vmem, size = 0x200000, scoped, tag = 'input window, operand 0']
    #allocation3 [shape = 's32[2]{0}', space=sflag, size = 0x8, scoped, tag = 'scoped memory for tpu_custom_call.1']
    #allocation4 [shape = 's32[2]{0}', space=sflag, size = 0x8, scoped, tag = 'scoped memory for tpu_custom_call.1']
    #allocation5 [shape = 'u8[2097152]{0}', space=vmem, size = 0x200000, scoped, tag = 'output window, operand 0']
    %6 = vsyncpa [#allocation3], 0
    %s7 = scalar_lea.sflag [#allocation3], 1
    %8 = vsyncpa %s7, 0
    %9 = vsyncpa [#allocation4], 0
    %s10 = scalar_lea.sflag [#allocation4], 1
    %11 = vsyncpa %s10, 0
    loop: start=0, step=1, limit=6
    $region2: #{tpu_custom_call.1} parent=1 // loop_pre_header
      _
    $region3: #{tpu_custom_call.1} parent=1 // loop_header
      %s13 = sphi 0, %s17
      %p14 = scmp.ge.s32.totalorder %s13, 6
      %s23 = sphi 0, %s25
      %s26 = sphi 0, %s23
      %s27 = sphi 0, %s26
      %s43 = sphi 0, %s27
      %s49 = sphi 0, %s51
      %s52 = sphi 0, %s49
      %s53 = sphi 0, %s52
      %s69 = sphi 0, %s53
    $region4: #{tpu_custom_call.1} parent=1 // loop_header_branch
      %16 = sbr.rel (%p14) target = $region8
    $region5: #{tpu_custom_call.1} parent=1 // loop_body
      %s18 = ssub.s32 %s13, 1
      %s19 = ssub.s32 %s13, 2
      %s20 = sadd.s32 %s13, 1
      %s21 = ssub.s32 %s13, %s20
      %p22 = scmp.eq.s32.totalorder %s21, 0
      %s24 = sadd.s32 %s23, 1
      %s25 = scalar_select %p22, %s23, %s24
      %p28 = pneg %p22
      %p29 = scmp.eq.s32.totalorder %s13, 3
      %p30 = por %p28, %p29
      %p31 = scmp.ne.s32.totalorder %s23, %s26
      %p32 = scmp.eq.s32.totalorder %s13, 0
      %p33 = por %p31, %p32
      %p34 = scmp.ne.s32.totalorder %s23, %s26
      %p35 = scmp.eq.s32.totalorder %s18, 3
      %p36 = por %p34, %p35
      %p37 = scmp.ne.s32.totalorder %s26, %s27
      %p38 = scmp.eq.s32.totalorder %s18, 0
      %p39 = por %p37, %p38
      %p40 = scmp.ne.s32.totalorder %s26, %s27
      %p41 = scmp.eq.s32.totalorder %s19, 3
      %p42 = por %p40, %p41
      %p44 = scmp.ne.s32.totalorder %s27, %s43
      %p45 = scmp.eq.s32.totalorder %s19, 0
      %p46 = por %p44, %p45
      %s47 = ssub.s32 %s13, %s20
      %p48 = scmp.eq.s32.totalorder %s47, 0
      %s50 = sadd.s32 %s49, 1
      %s51 = scalar_select %p48, %s49, %s50
      %p54 = pneg %p48
      %p55 = scmp.eq.s32.totalorder %s13, 3
      %p56 = por %p54, %p55
      %p57 = scmp.ne.s32.totalorder %s49, %s52
      %p58 = scmp.eq.s32.totalorder %s13, 0
      %p59 = por %p57, %p58
      %p60 = scmp.ne.s32.totalorder %s49, %s52
      %p61 = scmp.eq.s32.totalorder %s18, 3
      %p62 = por %p60, %p61
      %p63 = scmp.ne.s32.totalorder %s52, %s53
      %p64 = scmp.eq.s32.totalorder %s18, 0
      %p65 = por %p63, %p64
      %p66 = scmp.ne.s32.totalorder %s52, %s53
      %p67 = scmp.eq.s32.totalorder %s19, 3
      %p68 = por %p66, %p67
      %p70 = scmp.ne.s32.totalorder %s53, %s69
      %p71 = scmp.eq.s32.totalorder %s19, 0
      %p72 = por %p70, %p71
      %p73 = scmp.le.s32.totalorder 1, %s13
      %p74 = scmp.lt.s32.totalorder %s13, 5
      %p75 = pnand %p73, %p74
      %p76 = pneg %p75
      // Predicated region
      $region9: #{tpu_custom_call.1} parent=5 // pred_check
        _
      $region10: #{tpu_custom_call.1} parent=5 // pred_check_branch
        %78 = sbr.rel (%p75) target = $region12
      $region11: #{tpu_custom_call.1} parent=5 // pred_region
        %s79 = ssub.s32 %s13, 1
      $region12: #{tpu_custom_call.1} parent=5 // pred_fallthru
        _
      %p80 = scmp.lt.s32.totalorder %s13, 4
      // Predicated region
      $region13: #{tpu_custom_call.1} parent=5 // pred_check
        %p81 = pneg %p80
      $region14: #{tpu_custom_call.1} parent=5 // pred_check_branch
        %83 = sbr.rel (%p81) target = $region16
      $region15: #{tpu_custom_call.1} parent=5 // pred_region
        // Predicated region
        $region17: #{tpu_custom_call.1} parent=15 // pred_check
          %p84 = pneg %p33
        $region18: #{tpu_custom_call.1} parent=15 // pred_check_branch
          %86 = sbr.rel (%p84) target = $region20
        $region19: #{tpu_custom_call.1} parent=15 // pred_region
          %s87 = sand.u32 %s23, 1
          %s88 = scalar_lea.sflag [#allocation3], %s87
          %s89 = sand.u32 %s23, 1
          %s90 = smul.addr %s89, 2048
          %s91 = scalar_lea.vmem [#allocation2], %s90
          %s92 = smul.u32 16, %s13
          %s94 = ssub.s32 32768, 32768
          %95 = vsyncadd %s88, %s94
          %s96 = smul.addr %s92, 16
          %s97 = smul.addr %s96, 128
          %s98 = scalar_lea.hbm %s0, %s97
          %s99 = sshll.u32 %s91, 4
          %s100 = int_to_ptr.vmem [resolvable:$true] %s99
          %105 = dma.hbm_to_vmem [thread:$0]  %s98, 32768, %s100, %s88, 2048, 2048, 128
        $region20: #{tpu_custom_call.1} parent=15 // pred_fallthru
          _
      $region16: #{tpu_custom_call.1} parent=5 // pred_fallthru
        _
      %p106 = scmp.le.s32.totalorder 1, %s13
      %p107 = scmp.lt.s32.totalorder %s13, 5
      %p108 = pnand %p106, %p107
      %p109 = pneg %p108
      // Predicated region
      $region21: #{tpu_custom_call.1} parent=5 // pred_check
        _
      $region22: #{tpu_custom_call.1} parent=5 // pred_check_branch
        %111 = sbr.rel (%p108) target = $region24
      $region23: #{tpu_custom_call.1} parent=5 // pred_region
        %s112 = ssub.s32 %s13, 1
        %s113 = sand.u32 %s26, 1
        %s114 = scalar_lea.sflag [#allocation3], %s113
        %s115 = sand.u32 %s26, 1
        %s116 = smul.addr %s115, 2048
        %s117 = scalar_lea.vmem [#allocation2], %s116
        // Predicated region
        $region25: #{tpu_custom_call.1} parent=23 // pred_check
          %p118 = pneg %p39
        $region26: #{tpu_custom_call.1} parent=23 // pred_check_branch
          %120 = sbr.rel (%p118) target = $region28
        $region27: #{tpu_custom_call.1} parent=23 // pred_region
          %121 = dma.done %s114, 32768
        $region28: #{tpu_custom_call.1} parent=23 // pred_fallthru
          _
        %s122 = sand.u32 %s26, 1
        %s123 = scalar_lea.sflag [#allocation3], %s122
        %s124 = sand.u32 %s26, 1
        %s125 = smul.addr %s124, 2048
        %s126 = scalar_lea.vmem [#allocation2], %s125
        %p127 = pneg %p39
        %p128 = pneg %p36
        %p129 = pneg %p65
        %p130 = pneg %p62
        %s131 = sand.u32 %s52, 1
        %s132 = scalar_lea.sflag [#allocation4], %s131
        %s133 = sand.u32 %s52, 1
        %s134 = smul.addr %s133, 2048
        %s135 = scalar_lea.vmem [#allocation5], %s134
        %s136 = smul.u32 16, %s18
        %s137 = smul.u32 16, %s18
        %v138 = vld [vmem:[%s117] sm:$0xff]
        %v139 = vld [vmem:[%s117 + $0x8] sm:$0xff]
        %v140 = vld [vmem:[%s117 + $0x10] sm:$0xff]
        %v141 = vld [vmem:[%s117 + $0x18] sm:$0xff]
        %v142 = vld [vmem:[%s117 + $0x20] sm:$0xff]
        %v143 = vld [vmem:[%s117 + $0x28] sm:$0xff]
        %v144 = vld [vmem:[%s117 + $0x30] sm:$0xff]
        %v145 = vld [vmem:[%s117 + $0x38] sm:$0xff]
        %v146 = vld [vmem:[%s117 + $0x40] sm:$0xff]
        %v147 = vld [vmem:[%s117 + $0x48] sm:$0xff]
        %v148 = vld [vmem:[%s117 + $0x50] sm:$0xff]
        %v149 = vld [vmem:[%s117 + $0x58] sm:$0xff]
        %v150 = vld [vmem:[%s117 + $0x60] sm:$0xff]
        %v151 = vld [vmem:[%s117 + $0x68] sm:$0xff]
        %v152 = vld [vmem:[%s117 + $0x70] sm:$0xff]
        %v153 = vld [vmem:[%s117 + $0x78] sm:$0xff]
        %v154 = vld [vmem:[%s117 + $0x80] sm:$0xff]
        %v155 = vld [vmem:[%s117 + $0x88] sm:$0xff]
        %v156 = vld [vmem:[%s117 + $0x90] sm:$0xff]
        %v157 = vld [vmem:[%s117 + $0x98] sm:$0xff]
        %v158 = vld [vmem:[%s117 + $0xa0] sm:$0xff]
        %v159 = vld [vmem:[%s117 + $0xa8] sm:$0xff]
        %v160 = vld [vmem:[%s117 + $0xb0] sm:$0xff]
        %v161 = vld [vmem:[%s117 + $0xb8] sm:$0xff]
        %v162 = vld [vmem:[%s117 + $0xc0] sm:$0xff]
        %v163 = vld [vmem:[%s117 + $0xc8] sm:$0xff]
        %v164 = vld [vmem:[%s117 + $0xd0] sm:$0xff]
        %v165 = vld [vmem:[%s117 + $0xd8] sm:$0xff]
        %v166 = vld [vmem:[%s117 + $0xe0] sm:$0xff]
        %v167 = vld [vmem:[%s117 + $0xe8] sm:$0xff]
        %v168 = vld [vmem:[%s117 + $0xf0] sm:$0xff]
        %v169 = vld [vmem:[%s117 + $0xf8] sm:$0xff]
        %v170 = vld [vmem:[%s117 + $0x100] sm:$0xff]
        %v171 = vld [vmem:[%s117 + $0x108] sm:$0xff]
        %v172 = vld [vmem:[%s117 + $0x110] sm:$0xff]
        %v173 = vld [vmem:[%s117 + $0x118] sm:$0xff]
        %v174 = vld [vmem:[%s117 + $0x120] sm:$0xff]
        %v175 = vld [vmem:[%s117 + $0x128] sm:$0xff]
        %v176 = vld [vmem:[%s117 + $0x130] sm:$0xff]
        %v177 = vld [vmem:[%s117 + $0x138] sm:$0xff]
        %v178 = vld [vmem:[%s117 + $0x140] sm:$0xff]
        %v179 = vld [vmem:[%s117 + $0x148] sm:$0xff]
        %v180 = vld [vmem:[%s117 + $0x150] sm:$0xff]
        %v181 = vld [vmem:[%s117 + $0x158] sm:$0xff]
        %v182 = vld [vmem:[%s117 + $0x160] sm:$0xff]
        %v183 = vld [vmem:[%s117 + $0x168] sm:$0xff]
        %v184 = vld [vmem:[%s117 + $0x170] sm:$0xff]
        %v185 = vld [vmem:[%s117 + $0x178] sm:$0xff]
        %v186 = vld [vmem:[%s117 + $0x180] sm:$0xff]
        %v187 = vld [vmem:[%s117 + $0x188] sm:$0xff]
        %v188 = vld [vmem:[%s117 + $0x190] sm:$0xff]
        %v189 = vld [vmem:[%s117 + $0x198] sm:$0xff]
        %v190 = vld [vmem:[%s117 + $0x1a0] sm:$0xff]
        %v191 = vld [vmem:[%s117 + $0x1a8] sm:$0xff]
        %v192 = vld [vmem:[%s117 + $0x1b0] sm:$0xff]
        %v193 = vld [vmem:[%s117 + $0x1b8] sm:$0xff]
        %v194 = vld [vmem:[%s117 + $0x1c0] sm:$0xff]
        %v195 = vld [vmem:[%s117 + $0x1c8] sm:$0xff]
        %v196 = vld [vmem:[%s117 + $0x1d0] sm:$0xff]
        %v197 = vld [vmem:[%s117 + $0x1d8] sm:$0xff]
        %v198 = vld [vmem:[%s117 + $0x1e0] sm:$0xff]
        %v199 = vld [vmem:[%s117 + $0x1e8] sm:$0xff]
        %v200 = vld [vmem:[%s117 + $0x1f0] sm:$0xff]
        %v201 = vld [vmem:[%s117 + $0x1f8] sm:$0xff]
        %v202 = vld [vmem:[%s117 + $0x200] sm:$0xff]
        %v203 = vld [vmem:[%s117 + $0x208] sm:$0xff]
        %v204 = vld [vmem:[%s117 + $0x210] sm:$0xff]
        %v205 = vld [vmem:[%s117 + $0x218] sm:$0xff]
        %v206 = vld [vmem:[%s117 + $0x220] sm:$0xff]
        %v207 = vld [vmem:[%s117 + $0x228] sm:$0xff]
        %v208 = vld [vmem:[%s117 + $0x230] sm:$0xff]
        %v209 = vld [vmem:[%s117 + $0x238] sm:$0xff]
        %v210 = vld [vmem:[%s117 + $0x240] sm:$0xff]
        %v211 = vld [vmem:[%s117 + $0x248] sm:$0xff]
        %v212 = vld [vmem:[%s117 + $0x250] sm:$0xff]
        %v213 = vld [vmem:[%s117 + $0x258] sm:$0xff]
        %v214 = vld [vmem:[%s117 + $0x260] sm:$0xff]
        %v215 = vld [vmem:[%s117 + $0x268] sm:$0xff]
        %v216 = vld [vmem:[%s117 + $0x270] sm:$0xff]
        %v217 = vld [vmem:[%s117 + $0x278] sm:$0xff]
        %v218 = vld [vmem:[%s117 + $0x280] sm:$0xff]
        %v219 = vld [vmem:[%s117 + $0x288] sm:$0xff]
        %v220 = vld [vmem:[%s117 + $0x290] sm:$0xff]
        %v221 = vld [vmem:[%s117 + $0x298] sm:$0xff]
        %v222 = vld [vmem:[%s117 + $0x2a0] sm:$0xff]
        %v223 = vld [vmem:[%s117 + $0x2a8] sm:$0xff]
        %v224 = vld [vmem:[%s117 + $0x2b0] sm:$0xff]
        %v225 = vld [vmem:[%s117 + $0x2b8] sm:$0xff]
        %v226 = vld [vmem:[%s117 + $0x2c0] sm:$0xff]
        %v227 = vld [vmem:[%s117 + $0x2c8] sm:$0xff]
        %v228 = vld [vmem:[%s117 + $0x2d0] sm:$0xff]
        %v229 = vld [vmem:[%s117 + $0x2d8] sm:$0xff]
        %v230 = vld [vmem:[%s117 + $0x2e0] sm:$0xff]
        %v231 = vld [vmem:[%s117 + $0x2e8] sm:$0xff]
        %v232 = vld [vmem:[%s117 + $0x2f0] sm:$0xff]
        %v233 = vld [vmem:[%s117 + $0x2f8] sm:$0xff]
        %v234 = vld [vmem:[%s117 + $0x300] sm:$0xff]
        %v235 = vld [vmem:[%s117 + $0x308] sm:$0xff]
        %v236 = vld [vmem:[%s117 + $0x310] sm:$0xff]
        %v237 = vld [vmem:[%s117 + $0x318] sm:$0xff]
        %v238 = vld [vmem:[%s117 + $0x320] sm:$0xff]
        %v239 = vld [vmem:[%s117 + $0x328] sm:$0xff]
        %v240 = vld [vmem:[%s117 + $0x330] sm:$0xff]
        %v241 = vld [vmem:[%s117 + $0x338] sm:$0xff]
        %v242 = vld [vmem:[%s117 + $0x340] sm:$0xff]
        %v243 = vld [vmem:[%s117 + $0x348] sm:$0xff]
        %v244 = vld [vmem:[%s117 + $0x350] sm:$0xff]
        %v245 = vld [vmem:[%s117 + $0x358] sm:$0xff]
        %v246 = vld [vmem:[%s117 + $0x360] sm:$0xff]
        %v247 = vld [vmem:[%s117 + $0x368] sm:$0xff]
        %v248 = vld [vmem:[%s117 + $0x370] sm:$0xff]
        %v249 = vld [vmem:[%s117 + $0x378] sm:$0xff]
        %v250 = vld [vmem:[%s117 + $0x380] sm:$0xff]
        %v251 = vld [vmem:[%s117 + $0x388] sm:$0xff]
        %v252 = vld [vmem:[%s117 + $0x390] sm:$0xff]
        %v253 = vld [vmem:[%s117 + $0x398] sm:$0xff]
        %v254 = vld [vmem:[%s117 + $0x3a0] sm:$0xff]
        %v255 = vld [vmem:[%s117 + $0x3a8] sm:$0xff]
        %v256 = vld [vmem:[%s117 + $0x3b0] sm:$0xff]
        %v257 = vld [vmem:[%s117 + $0x3b8] sm:$0xff]
        %v258 = vld [vmem:[%s117 + $0x3c0] sm:$0xff]
        %v259 = vld [vmem:[%s117 + $0x3c8] sm:$0xff]
        %v260 = vld [vmem:[%s117 + $0x3d0] sm:$0xff]
        %v261 = vld [vmem:[%s117 + $0x3d8] sm:$0xff]
        %v262 = vld [vmem:[%s117 + $0x3e0] sm:$0xff]
        %v263 = vld [vmem:[%s117 + $0x3e8] sm:$0xff]
        %v264 = vld [vmem:[%s117 + $0x3f0] sm:$0xff]
        %v265 = vld [vmem:[%s117 + $0x3f8] sm:$0xff]
        %v266 = vld [vmem:[%s117 + $0x400] sm:$0xff]
        %v267 = vld [vmem:[%s117 + $0x408] sm:$0xff]
        %v268 = vld [vmem:[%s117 + $0x410] sm:$0xff]
        %v269 = vld [vmem:[%s117 + $0x418] sm:$0xff]
        %v270 = vld [vmem:[%s117 + $0x420] sm:$0xff]
        %v271 = vld [vmem:[%s117 + $0x428] sm:$0xff]
        %v272 = vld [vmem:[%s117 + $0x430] sm:$0xff]
        %v273 = vld [vmem:[%s117 + $0x438] sm:$0xff]
        %v274 = vld [vmem:[%s117 + $0x440] sm:$0xff]
        %v275 = vld [vmem:[%s117 + $0x448] sm:$0xff]
        %v276 = vld [vmem:[%s117 + $0x450] sm:$0xff]
        %v277 = vld [vmem:[%s117 + $0x458] sm:$0xff]
        %v278 = vld [vmem:[%s117 + $0x460] sm:$0xff]
        %v279 = vld [vmem:[%s117 + $0x468] sm:$0xff]
        %v280 = vld [vmem:[%s117 + $0x470] sm:$0xff]
        %v281 = vld [vmem:[%s117 + $0x478] sm:$0xff]
        %v282 = vld [vmem:[%s117 + $0x480] sm:$0xff]
        %v283 = vld [vmem:[%s117 + $0x488] sm:$0xff]
        %v284 = vld [vmem:[%s117 + $0x490] sm:$0xff]
        %v285 = vld [vmem:[%s117 + $0x498] sm:$0xff]
        %v286 = vld [vmem:[%s117 + $0x4a0] sm:$0xff]
        %v287 = vld [vmem:[%s117 + $0x4a8] sm:$0xff]
        %v288 = vld [vmem:[%s117 + $0x4b0] sm:$0xff]
        %v289 = vld [vmem:[%s117 + $0x4b8] sm:$0xff]
        %v290 = vld [vmem:[%s117 + $0x4c0] sm:$0xff]
        %v291 = vld [vmem:[%s117 + $0x4c8] sm:$0xff]
        %v292 = vld [vmem:[%s117 + $0x4d0] sm:$0xff]
        %v293 = vld [vmem:[%s117 + $0x4d8] sm:$0xff]
        %v294 = vld [vmem:[%s117 + $0x4e0] sm:$0xff]
        %v295 = vld [vmem:[%s117 + $0x4e8] sm:$0xff]
        %v296 = vld [vmem:[%s117 + $0x4f0] sm:$0xff]
        %v297 = vld [vmem:[%s117 + $0x4f8] sm:$0xff]
        %v298 = vld [vmem:[%s117 + $0x500] sm:$0xff]
        %v299 = vld [vmem:[%s117 + $0x508] sm:$0xff]
        %v300 = vld [vmem:[%s117 + $0x510] sm:$0xff]
        %v301 = vld [vmem:[%s117 + $0x518] sm:$0xff]
        %v302 = vld [vmem:[%s117 + $0x520] sm:$0xff]
        %v303 = vld [vmem:[%s117 + $0x528] sm:$0xff]
        %v304 = vld [vmem:[%s117 + $0x530] sm:$0xff]
        %v305 = vld [vmem:[%s117 + $0x538] sm:$0xff]
        %v306 = vld [vmem:[%s117 + $0x540] sm:$0xff]
        %v307 = vld [vmem:[%s117 + $0x548] sm:$0xff]
        %v308 = vld [vmem:[%s117 + $0x550] sm:$0xff]
        %v309 = vld [vmem:[%s117 + $0x558] sm:$0xff]
        %v310 = vld [vmem:[%s117 + $0x560] sm:$0xff]
        %v311 = vld [vmem:[%s117 + $0x568] sm:$0xff]
        %v312 = vld [vmem:[%s117 + $0x570] sm:$0xff]
        %v313 = vld [vmem:[%s117 + $0x578] sm:$0xff]
        %v314 = vld [vmem:[%s117 + $0x580] sm:$0xff]
        %v315 = vld [vmem:[%s117 + $0x588] sm:$0xff]
        %v316 = vld [vmem:[%s117 + $0x590] sm:$0xff]
        %v317 = vld [vmem:[%s117 + $0x598] sm:$0xff]
        %v318 = vld [vmem:[%s117 + $0x5a0] sm:$0xff]
        %v319 = vld [vmem:[%s117 + $0x5a8] sm:$0xff]
        %v320 = vld [vmem:[%s117 + $0x5b0] sm:$0xff]
        %v321 = vld [vmem:[%s117 + $0x5b8] sm:$0xff]
        %v322 = vld [vmem:[%s117 + $0x5c0] sm:$0xff]
        %v323 = vld [vmem:[%s117 + $0x5c8] sm:$0xff]
        %v324 = vld [vmem:[%s117 + $0x5d0] sm:$0xff]
        %v325 = vld [vmem:[%s117 + $0x5d8] sm:$0xff]
        %v326 = vld [vmem:[%s117 + $0x5e0] sm:$0xff]
        %v327 = vld [vmem:[%s117 + $0x5e8] sm:$0xff]
        %v328 = vld [vmem:[%s117 + $0x5f0] sm:$0xff]
        %v329 = vld [vmem:[%s117 + $0x5f8] sm:$0xff]
        %v330 = vld [vmem:[%s117 + $0x600] sm:$0xff]
        %v331 = vld [vmem:[%s117 + $0x608] sm:$0xff]
        %v332 = vld [vmem:[%s117 + $0x610] sm:$0xff]
        %v333 = vld [vmem:[%s117 + $0x618] sm:$0xff]
        %v334 = vld [vmem:[%s117 + $0x620] sm:$0xff]
        %v335 = vld [vmem:[%s117 + $0x628] sm:$0xff]
        %v336 = vld [vmem:[%s117 + $0x630] sm:$0xff]
        %v337 = vld [vmem:[%s117 + $0x638] sm:$0xff]
        %v338 = vld [vmem:[%s117 + $0x640] sm:$0xff]
        %v339 = vld [vmem:[%s117 + $0x648] sm:$0xff]
        %v340 = vld [vmem:[%s117 + $0x650] sm:$0xff]
        %v341 = vld [vmem:[%s117 + $0x658] sm:$0xff]
        %v342 = vld [vmem:[%s117 + $0x660] sm:$0xff]
        %v343 = vld [vmem:[%s117 + $0x668] sm:$0xff]
        %v344 = vld [vmem:[%s117 + $0x670] sm:$0xff]
        %v345 = vld [vmem:[%s117 + $0x678] sm:$0xff]
        %v346 = vld [vmem:[%s117 + $0x680] sm:$0xff]
        %v347 = vld [vmem:[%s117 + $0x688] sm:$0xff]
        %v348 = vld [vmem:[%s117 + $0x690] sm:$0xff]
        %v349 = vld [vmem:[%s117 + $0x698] sm:$0xff]
        %v350 = vld [vmem:[%s117 + $0x6a0] sm:$0xff]
        %v351 = vld [vmem:[%s117 + $0x6a8] sm:$0xff]
        %v352 = vld [vmem:[%s117 + $0x6b0] sm:$0xff]
        %v353 = vld [vmem:[%s117 + $0x6b8] sm:$0xff]
        %v354 = vld [vmem:[%s117 + $0x6c0] sm:$0xff]
        %v355 = vld [vmem:[%s117 + $0x6c8] sm:$0xff]
        %v356 = vld [vmem:[%s117 + $0x6d0] sm:$0xff]
        %v357 = vld [vmem:[%s117 + $0x6d8] sm:$0xff]
        %v358 = vld [vmem:[%s117 + $0x6e0] sm:$0xff]
        %v359 = vld [vmem:[%s117 + $0x6e8] sm:$0xff]
        %v360 = vld [vmem:[%s117 + $0x6f0] sm:$0xff]
        %v361 = vld [vmem:[%s117 + $0x6f8] sm:$0xff]
        %v362 = vld [vmem:[%s117 + $0x700] sm:$0xff]
        %v363 = vld [vmem:[%s117 + $0x708] sm:$0xff]
        %v364 = vld [vmem:[%s117 + $0x710] sm:$0xff]
        %v365 = vld [vmem:[%s117 + $0x718] sm:$0xff]
        %v366 = vld [vmem:[%s117 + $0x720] sm:$0xff]
        %v367 = vld [vmem:[%s117 + $0x728] sm:$0xff]
        %v368 = vld [vmem:[%s117 + $0x730] sm:$0xff]
        %v369 = vld [vmem:[%s117 + $0x738] sm:$0xff]
        %v370 = vld [vmem:[%s117 + $0x740] sm:$0xff]
        %v371 = vld [vmem:[%s117 + $0x748] sm:$0xff]
        %v372 = vld [vmem:[%s117 + $0x750] sm:$0xff]
        %v373 = vld [vmem:[%s117 + $0x758] sm:$0xff]
        %v374 = vld [vmem:[%s117 + $0x760] sm:$0xff]
        %v375 = vld [vmem:[%s117 + $0x768] sm:$0xff]
        %v376 = vld [vmem:[%s117 + $0x770] sm:$0xff]
        %v377 = vld [vmem:[%s117 + $0x778] sm:$0xff]
        %v378 = vld [vmem:[%s117 + $0x780] sm:$0xff]
        %v379 = vld [vmem:[%s117 + $0x788] sm:$0xff]
        %v380 = vld [vmem:[%s117 + $0x790] sm:$0xff]
        %v381 = vld [vmem:[%s117 + $0x798] sm:$0xff]
        %v382 = vld [vmem:[%s117 + $0x7a0] sm:$0xff]
        %v383 = vld [vmem:[%s117 + $0x7a8] sm:$0xff]
        %v384 = vld [vmem:[%s117 + $0x7b0] sm:$0xff]
        %v385 = vld [vmem:[%s117 + $0x7b8] sm:$0xff]
        %v386 = vld [vmem:[%s117 + $0x7c0] sm:$0xff]
        %v387 = vld [vmem:[%s117 + $0x7c8] sm:$0xff]
        %v388 = vld [vmem:[%s117 + $0x7d0] sm:$0xff]
        %v389 = vld [vmem:[%s117 + $0x7d8] sm:$0xff]
        %v390 = vld [vmem:[%s117 + $0x7e0] sm:$0xff]
        %v391 = vld [vmem:[%s117 + $0x7e8] sm:$0xff]
        %v392 = vld [vmem:[%s117 + $0x7f0] sm:$0xff]
        %v393 = vld [vmem:[%s117 + $0x7f8] sm:$0xff]
        %394 = vst [vmem:[%s135] sm:$0xff] %v138
        %395 = vst [vmem:[%s135 + $0x8] sm:$0xff] %v139
        %396 = vst [vmem:[%s135 + $0x10] sm:$0xff] %v140
        %397 = vst [vmem:[%s135 + $0x18] sm:$0xff] %v141
        %398 = vst [vmem:[%s135 + $0x20] sm:$0xff] %v142
        %399 = vst [vmem:[%s135 + $0x28] sm:$0xff] %v143
        %400 = vst [vmem:[%s135 + $0x30] sm:$0xff] %v144
        %401 = vst [vmem:[%s135 + $0x38] sm:$0xff] %v145
        %402 = vst [vmem:[%s135 + $0x40] sm:$0xff] %v146
        %403 = vst [vmem:[%s135 + $0x48] sm:$0xff] %v147
        %404 = vst [vmem:[%s135 + $0x50] sm:$0xff] %v148
        %405 = vst [vmem:[%s135 + $0x58] sm:$0xff] %v149
        %406 = vst [vmem:[%s135 + $0x60] sm:$0xff] %v150
        %407 = vst [vmem:[%s135 + $0x68] sm:$0xff] %v151
        %408 = vst [vmem:[%s135 + $0x70] sm:$0xff] %v152
        %409 = vst [vmem:[%s135 + $0x78] sm:$0xff] %v153
        %410 = vst [vmem:[%s135 + $0x80] sm:$0xff] %v154
        %411 = vst [vmem:[%s135 + $0x88] sm:$0xff] %v155
        %412 = vst [vmem:[%s135 + $0x90] sm:$0xff] %v156
        %413 = vst [vmem:[%s135 + $0x98] sm:$0xff] %v157
        %414 = vst [vmem:[%s135 + $0xa0] sm:$0xff] %v158
        %415 = vst [vmem:[%s135 + $0xa8] sm:$0xff] %v159
        %416 = vst [vmem:[%s135 + $0xb0] sm:$0xff] %v160
        %417 = vst [vmem:[%s135 + $0xb8] sm:$0xff] %v161
        %418 = vst [vmem:[%s135 + $0xc0] sm:$0xff] %v162
        %419 = vst [vmem:[%s135 + $0xc8] sm:$0xff] %v163
        %420 = vst [vmem:[%s135 + $0xd0] sm:$0xff] %v164
        %421 = vst [vmem:[%s135 + $0xd8] sm:$0xff] %v165
        %422 = vst [vmem:[%s135 + $0xe0] sm:$0xff] %v166
        %423 = vst [vmem:[%s135 + $0xe8] sm:$0xff] %v167
        %424 = vst [vmem:[%s135 + $0xf0] sm:$0xff] %v168
        %425 = vst [vmem:[%s135 + $0xf8] sm:$0xff] %v169
        %426 = vst [vmem:[%s135 + $0x100] sm:$0xff] %v170
        %427 = vst [vmem:[%s135 + $0x108] sm:$0xff] %v171
        %428 = vst [vmem:[%s135 + $0x110] sm:$0xff] %v172
        %429 = vst [vmem:[%s135 + $0x118] sm:$0xff] %v173
        %430 = vst [vmem:[%s135 + $0x120] sm:$0xff] %v174
        %431 = vst [vmem:[%s135 + $0x128] sm:$0xff] %v175
        %432 = vst [vmem:[%s135 + $0x130] sm:$0xff] %v176
        %433 = vst [vmem:[%s135 + $0x138] sm:$0xff] %v177
        %434 = vst [vmem:[%s135 + $0x140] sm:$0xff] %v178
        %435 = vst [vmem:[%s135 + $0x148] sm:$0xff] %v179
        %436 = vst [vmem:[%s135 + $0x150] sm:$0xff] %v180
        %437 = vst [vmem:[%s135 + $0x158] sm:$0xff] %v181
        %438 = vst [vmem:[%s135 + $0x160] sm:$0xff] %v182
        %439 = vst [vmem:[%s135 + $0x168] sm:$0xff] %v183
        %440 = vst [vmem:[%s135 + $0x170] sm:$0xff] %v184
        %441 = vst [vmem:[%s135 + $0x178] sm:$0xff] %v185
        %442 = vst [vmem:[%s135 + $0x180] sm:$0xff] %v186
        %443 = vst [vmem:[%s135 + $0x188] sm:$0xff] %v187
        %444 = vst [vmem:[%s135 + $0x190] sm:$0xff] %v188
        %445 = vst [vmem:[%s135 + $0x198] sm:$0xff] %v189
        %446 = vst [vmem:[%s135 + $0x1a0] sm:$0xff] %v190
        %447 = vst [vmem:[%s135 + $0x1a8] sm:$0xff] %v191
        %448 = vst [vmem:[%s135 + $0x1b0] sm:$0xff] %v192
        %449 = vst [vmem:[%s135 + $0x1b8] sm:$0xff] %v193
        %450 = vst [vmem:[%s135 + $0x1c0] sm:$0xff] %v194
        %451 = vst [vmem:[%s135 + $0x1c8] sm:$0xff] %v195
        %452 = vst [vmem:[%s135 + $0x1d0] sm:$0xff] %v196
        %453 = vst [vmem:[%s135 + $0x1d8] sm:$0xff] %v197
        %454 = vst [vmem:[%s135 + $0x1e0] sm:$0xff] %v198
        %455 = vst [vmem:[%s135 + $0x1e8] sm:$0xff] %v199
        %456 = vst [vmem:[%s135 + $0x1f0] sm:$0xff] %v200
        %457 = vst [vmem:[%s135 + $0x1f8] sm:$0xff] %v201
        %458 = vst [vmem:[%s135 + $0x200] sm:$0xff] %v202
        %459 = vst [vmem:[%s135 + $0x208] sm:$0xff] %v203
        %460 = vst [vmem:[%s135 + $0x210] sm:$0xff] %v204
        %461 = vst [vmem:[%s135 + $0x218] sm:$0xff] %v205
        %462 = vst [vmem:[%s135 + $0x220] sm:$0xff] %v206
        %463 = vst [vmem:[%s135 + $0x228] sm:$0xff] %v207
        %464 = vst [vmem:[%s135 + $0x230] sm:$0xff] %v208
        %465 = vst [vmem:[%s135 + $0x238] sm:$0xff] %v209
        %466 = vst [vmem:[%s135 + $0x240] sm:$0xff] %v210
        %467 = vst [vmem:[%s135 + $0x248] sm:$0xff] %v211
        %468 = vst [vmem:[%s135 + $0x250] sm:$0xff] %v212
        %469 = vst [vmem:[%s135 + $0x258] sm:$0xff] %v213
        %470 = vst [vmem:[%s135 + $0x260] sm:$0xff] %v214
        %471 = vst [vmem:[%s135 + $0x268] sm:$0xff] %v215
        %472 = vst [vmem:[%s135 + $0x270] sm:$0xff] %v216
        %473 = vst [vmem:[%s135 + $0x278] sm:$0xff] %v217
        %474 = vst [vmem:[%s135 + $0x280] sm:$0xff] %v218
        %475 = vst [vmem:[%s135 + $0x288] sm:$0xff] %v219
        %476 = vst [vmem:[%s135 + $0x290] sm:$0xff] %v220
        %477 = vst [vmem:[%s135 + $0x298] sm:$0xff] %v221
        %478 = vst [vmem:[%s135 + $0x2a0] sm:$0xff] %v222
        %479 = vst [vmem:[%s135 + $0x2a8] sm:$0xff] %v223
        %480 = vst [vmem:[%s135 + $0x2b0] sm:$0xff] %v224
        %481 = vst [vmem:[%s135 + $0x2b8] sm:$0xff] %v225
        %482 = vst [vmem:[%s135 + $0x2c0] sm:$0xff] %v226
        %483 = vst [vmem:[%s135 + $0x2c8] sm:$0xff] %v227
        %484 = vst [vmem:[%s135 + $0x2d0] sm:$0xff] %v228
        %485 = vst [vmem:[%s135 + $0x2d8] sm:$0xff] %v229
        %486 = vst [vmem:[%s135 + $0x2e0] sm:$0xff] %v230
        %487 = vst [vmem:[%s135 + $0x2e8] sm:$0xff] %v231
        %488 = vst [vmem:[%s135 + $0x2f0] sm:$0xff] %v232
        %489 = vst [vmem:[%s135 + $0x2f8] sm:$0xff] %v233
        %490 = vst [vmem:[%s135 + $0x300] sm:$0xff] %v234
        %491 = vst [vmem:[%s135 + $0x308] sm:$0xff] %v235
        %492 = vst [vmem:[%s135 + $0x310] sm:$0xff] %v236
        %493 = vst [vmem:[%s135 + $0x318] sm:$0xff] %v237
        %494 = vst [vmem:[%s135 + $0x320] sm:$0xff] %v238
        %495 = vst [vmem:[%s135 + $0x328] sm:$0xff] %v239
        %496 = vst [vmem:[%s135 + $0x330] sm:$0xff] %v240
        %497 = vst [vmem:[%s135 + $0x338] sm:$0xff] %v241
        %498 = vst [vmem:[%s135 + $0x340] sm:$0xff] %v242
        %499 = vst [vmem:[%s135 + $0x348] sm:$0xff] %v243
        %500 = vst [vmem:[%s135 + $0x350] sm:$0xff] %v244
        %501 = vst [vmem:[%s135 + $0x358] sm:$0xff] %v245
        %502 = vst [vmem:[%s135 + $0x360] sm:$0xff] %v246
        %503 = vst [vmem:[%s135 + $0x368] sm:$0xff] %v247
        %504 = vst [vmem:[%s135 + $0x370] sm:$0xff] %v248
        %505 = vst [vmem:[%s135 + $0x378] sm:$0xff] %v249
        %506 = vst [vmem:[%s135 + $0x380] sm:$0xff] %v250
        %507 = vst [vmem:[%s135 + $0x388] sm:$0xff] %v251
        %508 = vst [vmem:[%s135 + $0x390] sm:$0xff] %v252
        %509 = vst [vmem:[%s135 + $0x398] sm:$0xff] %v253
        %510 = vst [vmem:[%s135 + $0x3a0] sm:$0xff] %v254
        %511 = vst [vmem:[%s135 + $0x3a8] sm:$0xff] %v255
        %512 = vst [vmem:[%s135 + $0x3b0] sm:$0xff] %v256
        %513 = vst [vmem:[%s135 + $0x3b8] sm:$0xff] %v257
        %514 = vst [vmem:[%s135 + $0x3c0] sm:$0xff] %v258
        %515 = vst [vmem:[%s135 + $0x3c8] sm:$0xff] %v259
        %516 = vst [vmem:[%s135 + $0x3d0] sm:$0xff] %v260
        %517 = vst [vmem:[%s135 + $0x3d8] sm:$0xff] %v261
        %518 = vst [vmem:[%s135 + $0x3e0] sm:$0xff] %v262
        %519 = vst [vmem:[%s135 + $0x3e8] sm:$0xff] %v263
        %520 = vst [vmem:[%s135 + $0x3f0] sm:$0xff] %v264
        %521 = vst [vmem:[%s135 + $0x3f8] sm:$0xff] %v265
        %522 = vst [vmem:[%s135 + $0x400] sm:$0xff] %v266
        %523 = vst [vmem:[%s135 + $0x408] sm:$0xff] %v267
        %524 = vst [vmem:[%s135 + $0x410] sm:$0xff] %v268
        %525 = vst [vmem:[%s135 + $0x418] sm:$0xff] %v269
        %526 = vst [vmem:[%s135 + $0x420] sm:$0xff] %v270
        %527 = vst [vmem:[%s135 + $0x428] sm:$0xff] %v271
        %528 = vst [vmem:[%s135 + $0x430] sm:$0xff] %v272
        %529 = vst [vmem:[%s135 + $0x438] sm:$0xff] %v273
        %530 = vst [vmem:[%s135 + $0x440] sm:$0xff] %v274
        %531 = vst [vmem:[%s135 + $0x448] sm:$0xff] %v275
        %532 = vst [vmem:[%s135 + $0x450] sm:$0xff] %v276
        %533 = vst [vmem:[%s135 + $0x458] sm:$0xff] %v277
        %534 = vst [vmem:[%s135 + $0x460] sm:$0xff] %v278
        %535 = vst [vmem:[%s135 + $0x468] sm:$0xff] %v279
        %536 = vst [vmem:[%s135 + $0x470] sm:$0xff] %v280
        %537 = vst [vmem:[%s135 + $0x478] sm:$0xff] %v281
        %538 = vst [vmem:[%s135 + $0x480] sm:$0xff] %v282
        %539 = vst [vmem:[%s135 + $0x488] sm:$0xff] %v283
        %540 = vst [vmem:[%s135 + $0x490] sm:$0xff] %v284
        %541 = vst [vmem:[%s135 + $0x498] sm:$0xff] %v285
        %542 = vst [vmem:[%s135 + $0x4a0] sm:$0xff] %v286
        %543 = vst [vmem:[%s135 + $0x4a8] sm:$0xff] %v287
        %544 = vst [vmem:[%s135 + $0x4b0] sm:$0xff] %v288
        %545 = vst [vmem:[%s135 + $0x4b8] sm:$0xff] %v289
        %546 = vst [vmem:[%s135 + $0x4c0] sm:$0xff] %v290
        %547 = vst [vmem:[%s135 + $0x4c8] sm:$0xff] %v291
        %548 = vst [vmem:[%s135 + $0x4d0] sm:$0xff] %v292
        %549 = vst [vmem:[%s135 + $0x4d8] sm:$0xff] %v293
        %550 = vst [vmem:[%s135 + $0x4e0] sm:$0xff] %v294
        %551 = vst [vmem:[%s135 + $0x4e8] sm:$0xff] %v295
        %552 = vst [vmem:[%s135 + $0x4f0] sm:$0xff] %v296
        %553 = vst [vmem:[%s135 + $0x4f8] sm:$0xff] %v297
        %554 = vst [vmem:[%s135 + $0x500] sm:$0xff] %v298
        %555 = vst [vmem:[%s135 + $0x508] sm:$0xff] %v299
        %556 = vst [vmem:[%s135 + $0x510] sm:$0xff] %v300
        %557 = vst [vmem:[%s135 + $0x518] sm:$0xff] %v301
        %558 = vst [vmem:[%s135 + $0x520] sm:$0xff] %v302
        %559 = vst [vmem:[%s135 + $0x528] sm:$0xff] %v303
        %560 = vst [vmem:[%s135 + $0x530] sm:$0xff] %v304
        %561 = vst [vmem:[%s135 + $0x538] sm:$0xff] %v305
        %562 = vst [vmem:[%s135 + $0x540] sm:$0xff] %v306
        %563 = vst [vmem:[%s135 + $0x548] sm:$0xff] %v307
        %564 = vst [vmem:[%s135 + $0x550] sm:$0xff] %v308
        %565 = vst [vmem:[%s135 + $0x558] sm:$0xff] %v309
        %566 = vst [vmem:[%s135 + $0x560] sm:$0xff] %v310
        %567 = vst [vmem:[%s135 + $0x568] sm:$0xff] %v311
        %568 = vst [vmem:[%s135 + $0x570] sm:$0xff] %v312
        %569 = vst [vmem:[%s135 + $0x578] sm:$0xff] %v313
        %570 = vst [vmem:[%s135 + $0x580] sm:$0xff] %v314
        %571 = vst [vmem:[%s135 + $0x588] sm:$0xff] %v315
        %572 = vst [vmem:[%s135 + $0x590] sm:$0xff] %v316
        %573 = vst [vmem:[%s135 + $0x598] sm:$0xff] %v317
        %574 = vst [vmem:[%s135 + $0x5a0] sm:$0xff] %v318
        %575 = vst [vmem:[%s135 + $0x5a8] sm:$0xff] %v319
        %576 = vst [vmem:[%s135 + $0x5b0] sm:$0xff] %v320
        %577 = vst [vmem:[%s135 + $0x5b8] sm:$0xff] %v321
        %578 = vst [vmem:[%s135 + $0x5c0] sm:$0xff] %v322
        %579 = vst [vmem:[%s135 + $0x5c8] sm:$0xff] %v323
        %580 = vst [vmem:[%s135 + $0x5d0] sm:$0xff] %v324
        %581 = vst [vmem:[%s135 + $0x5d8] sm:$0xff] %v325
        %582 = vst [vmem:[%s135 + $0x5e0] sm:$0xff] %v326
        %583 = vst [vmem:[%s135 + $0x5e8] sm:$0xff] %v327
        %584 = vst [vmem:[%s135 + $0x5f0] sm:$0xff] %v328
        %585 = vst [vmem:[%s135 + $0x5f8] sm:$0xff] %v329
        %586 = vst [vmem:[%s135 + $0x600] sm:$0xff] %v330
        %587 = vst [vmem:[%s135 + $0x608] sm:$0xff] %v331
        %588 = vst [vmem:[%s135 + $0x610] sm:$0xff] %v332
        %589 = vst [vmem:[%s135 + $0x618] sm:$0xff] %v333
        %590 = vst [vmem:[%s135 + $0x620] sm:$0xff] %v334
        %591 = vst [vmem:[%s135 + $0x628] sm:$0xff] %v335
        %592 = vst [vmem:[%s135 + $0x630] sm:$0xff] %v336
        %593 = vst [vmem:[%s135 + $0x638] sm:$0xff] %v337
        %594 = vst [vmem:[%s135 + $0x640] sm:$0xff] %v338
        %595 = vst [vmem:[%s135 + $0x648] sm:$0xff] %v339
        %596 = vst [vmem:[%s135 + $0x650] sm:$0xff] %v340
        %597 = vst [vmem:[%s135 + $0x658] sm:$0xff] %v341
        %598 = vst [vmem:[%s135 + $0x660] sm:$0xff] %v342
        %599 = vst [vmem:[%s135 + $0x668] sm:$0xff] %v343
        %600 = vst [vmem:[%s135 + $0x670] sm:$0xff] %v344
        %601 = vst [vmem:[%s135 + $0x678] sm:$0xff] %v345
        %602 = vst [vmem:[%s135 + $0x680] sm:$0xff] %v346
        %603 = vst [vmem:[%s135 + $0x688] sm:$0xff] %v347
        %604 = vst [vmem:[%s135 + $0x690] sm:$0xff] %v348
        %605 = vst [vmem:[%s135 + $0x698] sm:$0xff] %v349
        %606 = vst [vmem:[%s135 + $0x6a0] sm:$0xff] %v350
        %607 = vst [vmem:[%s135 + $0x6a8] sm:$0xff] %v351
        %608 = vst [vmem:[%s135 + $0x6b0] sm:$0xff] %v352
        %609 = vst [vmem:[%s135 + $0x6b8] sm:$0xff] %v353
        %610 = vst [vmem:[%s135 + $0x6c0] sm:$0xff] %v354
        %611 = vst [vmem:[%s135 + $0x6c8] sm:$0xff] %v355
        %612 = vst [vmem:[%s135 + $0x6d0] sm:$0xff] %v356
        %613 = vst [vmem:[%s135 + $0x6d8] sm:$0xff] %v357
        %614 = vst [vmem:[%s135 + $0x6e0] sm:$0xff] %v358
        %615 = vst [vmem:[%s135 + $0x6e8] sm:$0xff] %v359
        %616 = vst [vmem:[%s135 + $0x6f0] sm:$0xff] %v360
        %617 = vst [vmem:[%s135 + $0x6f8] sm:$0xff] %v361
        %618 = vst [vmem:[%s135 + $0x700] sm:$0xff] %v362
        %619 = vst [vmem:[%s135 + $0x708] sm:$0xff] %v363
        %620 = vst [vmem:[%s135 + $0x710] sm:$0xff] %v364
        %621 = vst [vmem:[%s135 + $0x718] sm:$0xff] %v365
        %622 = vst [vmem:[%s135 + $0x720] sm:$0xff] %v366
        %623 = vst [vmem:[%s135 + $0x728] sm:$0xff] %v367
        %624 = vst [vmem:[%s135 + $0x730] sm:$0xff] %v368
        %625 = vst [vmem:[%s135 + $0x738] sm:$0xff] %v369
        %626 = vst [vmem:[%s135 + $0x740] sm:$0xff] %v370
        %627 = vst [vmem:[%s135 + $0x748] sm:$0xff] %v371
        %628 = vst [vmem:[%s135 + $0x750] sm:$0xff] %v372
        %629 = vst [vmem:[%s135 + $0x758] sm:$0xff] %v373
        %630 = vst [vmem:[%s135 + $0x760] sm:$0xff] %v374
        %631 = vst [vmem:[%s135 + $0x768] sm:$0xff] %v375
        %632 = vst [vmem:[%s135 + $0x770] sm:$0xff] %v376
        %633 = vst [vmem:[%s135 + $0x778] sm:$0xff] %v377
        %634 = vst [vmem:[%s135 + $0x780] sm:$0xff] %v378
        %635 = vst [vmem:[%s135 + $0x788] sm:$0xff] %v379
        %636 = vst [vmem:[%s135 + $0x790] sm:$0xff] %v380
        %637 = vst [vmem:[%s135 + $0x798] sm:$0xff] %v381
        %638 = vst [vmem:[%s135 + $0x7a0] sm:$0xff] %v382
        %639 = vst [vmem:[%s135 + $0x7a8] sm:$0xff] %v383
        %640 = vst [vmem:[%s135 + $0x7b0] sm:$0xff] %v384
        %641 = vst [vmem:[%s135 + $0x7b8] sm:$0xff] %v385
        %642 = vst [vmem:[%s135 + $0x7c0] sm:$0xff] %v386
        %643 = vst [vmem:[%s135 + $0x7c8] sm:$0xff] %v387
        %644 = vst [vmem:[%s135 + $0x7d0] sm:$0xff] %v388
        %645 = vst [vmem:[%s135 + $0x7d8] sm:$0xff] %v389
        %646 = vst [vmem:[%s135 + $0x7e0] sm:$0xff] %v390
        %647 = vst [vmem:[%s135 + $0x7e8] sm:$0xff] %v391
        %648 = vst [vmem:[%s135 + $0x7f0] sm:$0xff] %v392
        %649 = vst [vmem:[%s135 + $0x7f8] sm:$0xff] %v393
        %s650 = sand.u32 %s52, 1
        %s651 = scalar_lea.sflag [#allocation4], %s650
        %s652 = sand.u32 %s52, 1
        %s653 = smul.addr %s652, 2048
        %s654 = scalar_lea.vmem [#allocation5], %s653
        // Predicated region
        $region29: #{tpu_custom_call.1} parent=23 // pred_check
          %p655 = pneg %p62
        $region30: #{tpu_custom_call.1} parent=23 // pred_check_branch
          %657 = sbr.rel (%p655) target = $region32
        $region31: #{tpu_custom_call.1} parent=23 // pred_region
          %s658 = smul.u32 16, %s18
          %s660 = ssub.s32 32768, 32768
          %661 = vsyncadd %s651, %s660
          %s662 = smul.addr %s658, 16
          %s663 = smul.addr %s662, 128
          %s664 = scalar_lea.hbm %s1, %s663
          %s665 = sshll.u32 %s654, 4
          %s666 = int_to_ptr.vmem [resolvable:$true] %s665
          %671 = dma.vmem_to_hbm [thread:$0]  %s666, 32768, %s664, %s651, 2048, 2048, 128
        $region32: #{tpu_custom_call.1} parent=23 // pred_fallthru
          _
      $region24: #{tpu_custom_call.1} parent=5 // pred_fallthru
        _
      %p672 = scmp.le.s32.totalorder 2, %s13
      // Predicated region
      $region33: #{tpu_custom_call.1} parent=5 // pred_check
        %p673 = pneg %p672
      $region34: #{tpu_custom_call.1} parent=5 // pred_check_branch
        %675 = sbr.rel (%p673) target = $region36
      $region35: #{tpu_custom_call.1} parent=5 // pred_region
        %s676 = ssub.s32 %s13, 2
        // Predicated region
        $region37: #{tpu_custom_call.1} parent=35 // pred_check
          %p677 = pneg %p68
        $region38: #{tpu_custom_call.1} parent=35 // pred_check_branch
          %679 = sbr.rel (%p677) target = $region40
        $region39: #{tpu_custom_call.1} parent=35 // pred_region
          %s680 = sand.u32 %s53, 1
          %s681 = scalar_lea.sflag [#allocation4], %s680
          %s682 = sand.u32 %s53, 1
          %s683 = smul.addr %s682, 2048
          %s684 = scalar_lea.vmem [#allocation5], %s683
          %685 = dma.done %s681, 32768
        $region40: #{tpu_custom_call.1} parent=35 // pred_fallthru
          _
      $region36: #{tpu_custom_call.1} parent=5 // pred_fallthru
        _
    $region6: #{tpu_custom_call.1} parent=1 // loop_footer
      %s17 = sadd.s32 1, %s13
    $region7: #{tpu_custom_call.1} parent=1 // loop_footer_branch
      %12 = sbr.rel target = $region3
    $region8: #{tpu_custom_call.1} parent=1 // loop_exit
      _
    %686 = vsyncpa [#allocation3], 1
    %s687 = scalar_lea.sflag [#allocation3], 1
    %688 = vsyncpa %s687, 1
    %689 = vsyncpa [#allocation4], 1
    %s690 = scalar_lea.sflag [#allocation4], 1
    %691 = vsyncpa %s690, 1

</llo_original>
